<compile_context>
chip_gen: v6e
topology: v6e:2x2x1
jax: 0.10.0
libtpu: 0.0.40
codegen_flags: <defaults>
</compile_context>

<pallas_src>
import functools

import jax
import jax.numpy as jnp
from jax import lax
from jax.experimental import pallas as pl
from jax.experimental.pallas import tpu as pltpu


# ---------------------------------------------------------------------------
# Kernel A: QKV projection into head-major layout (B, 3H, N, Dh).
# grid = (B, N // TR, 3H); W_qkv/b_qkv resident, x tile reused across heads.
# ---------------------------------------------------------------------------
def _qkv_proj_kernel(x_ref, w_ref, b_ref, qkv_ref):
    # x_ref:   (1, TR, E)       activation row-tile (f32, cast in-kernel)
    # w_ref:   (3H, E, Dh)      full head-major W_qkv, VMEM-resident (bf16)
    # b_ref:   (3H, 1, Dh)      full head-major bias, VMEM-resident (f32)
    # qkv_ref: (1, 1, TR, Dh)   output slab for head-slab c
    c = pl.program_id(2)
    xb = x_ref[0].astype(w_ref.dtype)          # in-kernel cast, hides under MXU
    acc = jnp.dot(xb, w_ref[c], preferred_element_type=jnp.float32)
    acc = acc + b_ref[c]
    qkv_ref[0, 0] = acc.astype(qkv_ref.dtype)


# ---------------------------------------------------------------------------
# Kernel B: attention + fused output projection.
# grid = (B, N // TQ, H); head axis is the reduction ("arbitrary") axis.
# K/V for the batch element and W_proj/b_proj are VMEM-resident.
# ---------------------------------------------------------------------------
def _attn_proj_kernel(q_ref, k_ref, v_ref, wp_ref, bp_ref, o_ref, acc_ref,
                      *, num_heads):
    h = pl.program_id(2)

    @pl.when(h == 0)
    def _init():
        acc_ref[...] = jnp.zeros_like(acc_ref)

    q = q_ref[0, 0]          # (TQ, Dh) bf16 — attention scale folded into W_qkv
    k = k_ref[0, h]          # (N,  Dh) bf16 — resident per-batch K, head via leading dim
    v = v_ref[0, h]          # (N,  Dh) bf16

    # Scores: contract head_dim of Q with head_dim of K in its stored layout
    # (no explicit .T / XLU transpose).
    s = lax.dot_general(q, k, (((1,), (1,)), ((), ())),
                        preferred_element_type=jnp.float32)          # (TQ, N) f32
    m = jnp.max(s, axis=-1, keepdims=True)
    p = jnp.exp(s - m)                                               # unnormalized
    denom = jnp.sum(p, axis=-1, keepdims=True)                       # (TQ, 1)

    o_h = jnp.dot(p.astype(v.dtype), v,
                  preferred_element_type=jnp.float32)                # (TQ, Dh) f32
    # Deferred softmax normalization on the small (TQ, Dh) block.
    o_h = o_h * pl.reciprocal(denom, approx=True)

    # Fused output projection: accumulate o_h @ W_proj[h] into (TQ, E) scratch.
    wp = wp_ref[h]                                                   # (Dh, E) resident
    acc_ref[...] += jnp.dot(o_h.astype(wp.dtype), wp,
                            preferred_element_type=jnp.float32)

    @pl.when(h == num_heads - 1)
    def _finalize():
        o_ref[0] = (acc_ref[...] + bp_ref[...]).astype(o_ref.dtype)


def _pick_tile(n, cap=512):
    """Largest multiple-of-8 divisor of n that is <= cap (or n itself)."""
    if n <= cap:
        return n
    for t in range(cap, 7, -8):
        if n % t == 0:
            return t
    # TODO(synk): prime/odd N falls back to full-N tiles; proper fix is a
    # cdiv grid with masked stores so the (TQ, N) score block stays bounded.
    return n


def _vmem_limit_bytes():
    """Generation-aware scoped-VMEM budget (~75% of physical, 32..100 MiB)."""
    try:
        phys = int(pltpu.get_tpu_info().vmem_capacity_bytes)
    except Exception:
        phys = 64 * 1024 * 1024
    return max(32 * 1024 * 1024, min((phys * 3) // 4, 100 * 1024 * 1024))


def prepare_mhsa_weights(w_qkv, b_qkv, w_proj, b_proj, *, num_heads,
                         compute_dtype=jnp.bfloat16):
    """One-time weight layout / cast transform (hoisted out of the call path)."""
    E = w_qkv.shape[0]
    H = num_heads
    Dh = E // H
    scale = float(Dh) ** -0.5

    # W_qkv columns are ordered (3, H, Dh) -> head-major (3H, E, Dh).
    w_hm = w_qkv.reshape(E, 3, H, Dh).transpose(1, 2, 0, 3).reshape(3 * H, E, Dh)
    b_hm = b_qkv.reshape(3 * H, 1, Dh).astype(jnp.float32)
    # Fold the attention scale into the Q projection (exact math, zero kernel cost).
    w_hm = w_hm.at[:H].multiply(scale)
    b_hm = b_hm.at[:H].multiply(scale)
    # W_proj rows are ordered (H, Dh) -> (H, Dh, E) (pure reshape, no transpose).
    w_proj_hm = w_proj.reshape(H, Dh, E)
    b_proj_2d = b_proj.reshape(1, E).astype(jnp.float32)

    return (w_hm.astype(compute_dtype), b_hm,
            w_proj_hm.astype(compute_dtype), b_proj_2d)


def multi_head_self_attention(x, w_qkv_hm, b_qkv_hm, w_proj_hm, b_proj_2d,
                              *, num_heads):
    """x: (B, N, E) float32; weights pre-prepared by prepare_mhsa_weights."""
    B, N, E = x.shape
    H = num_heads
    Dh = E // H
    compute_dtype = w_qkv_hm.dtype

    TR = _pick_tile(N)   # row tile for the QKV projection
    TQ = _pick_tile(N)   # query tile for attention
    vmem_cap = _vmem_limit_bytes()

    # ---- Kernel A: QKV projection, head-major output (B, 3H, N, Dh) ----
    qkv_hm = pl.pallas_call(
        _qkv_proj_kernel,
        out_shape=jax.ShapeDtypeStruct((B, 3 * H, N, Dh), compute_dtype),
        grid_spec=pltpu.PrefetchScalarGridSpec(
            num_scalar_prefetch=0,
            grid=(B, N // TR, 3 * H),
            in_specs=[
                # x tile: reused across the head axis (index_map ignores c).
                pl.BlockSpec((1, TR, E), lambda b, r, c: (b, r, 0)),
                # Full W_qkv / b_qkv, VMEM-resident (constant index_map).
                pl.BlockSpec((3 * H, E, Dh), lambda b, r, c: (0, 0, 0)),
                pl.BlockSpec((3 * H, 1, Dh), lambda b, r, c: (0, 0, 0)),
            ],
            out_specs=pl.BlockSpec((1, 1, TR, Dh), lambda b, r, c: (b, c, r, 0)),
        ),
        compiler_params=pltpu.CompilerParams(
            dimension_semantics=("parallel", "parallel", "arbitrary"),
            vmem_limit_bytes=vmem_cap),
    )(x, w_qkv_hm, b_qkv_hm)

    # ---- Kernel B: attention + output projection (reduce over heads) ----
    kernel_b = functools.partial(_attn_proj_kernel, num_heads=H)
    out = pl.pallas_call(
        kernel_b,
        out_shape=jax.ShapeDtypeStruct((B, N, E), x.dtype),
        grid_spec=pltpu.PrefetchScalarGridSpec(
            num_scalar_prefetch=0,
            grid=(B, N // TQ, H),
            in_specs=[
                # Q tile for the current head.
                pl.BlockSpec((1, 1, TQ, Dh), lambda b, qi, h: (b, h, qi, 0)),
                # K / V: all heads for batch element b, resident across qi and h
                # (block index along the 3H axis in units of H: 0=Q, 1=K, 2=V).
                pl.BlockSpec((1, H, N, Dh), lambda b, qi, h: (b, 1, 0, 0)),
                pl.BlockSpec((1, H, N, Dh), lambda b, qi, h: (b, 2, 0, 0)),
                # Full W_proj / b_proj, VMEM-resident (constant index_map).
                pl.BlockSpec((H, Dh, E), lambda b, qi, h: (0, 0, 0)),
                pl.BlockSpec((1, E), lambda b, qi, h: (0, 0)),
            ],
            out_specs=pl.BlockSpec((1, TQ, E), lambda b, qi, h: (b, qi, 0)),
            scratch_shapes=[pltpu.VMEM((TQ, E), jnp.float32)],
        ),
        compiler_params=pltpu.CompilerParams(
            dimension_semantics=("parallel", "parallel", "arbitrary"),
            vmem_limit_bytes=vmem_cap),
    )(qkv_hm, qkv_hm, qkv_hm, w_proj_hm, b_proj_2d)

    return out


def reference_mhsa(x, w_qkv, b_qkv, w_proj, b_proj, *, num_heads):
    B, N, E = x.shape
    Dh = E // num_heads
    scale = Dh ** -0.5
    qkv = x @ w_qkv + b_qkv                              # (B, N, 3E)
    qkv = qkv.reshape(B, N, 3, num_heads, Dh)
    q, k, v = jnp.moveaxis(qkv, 2, 0)                    # each (B, N, H, Dh)
    q = jnp.transpose(q, (0, 2, 1, 3))                   # (B, H, N, Dh)
    k = jnp.transpose(k, (0, 2, 1, 3))
    v = jnp.transpose(v, (0, 2, 1, 3))
    attn = jnp.einsum("bhnd,bhmd->bhnm", q, k) * scale
    attn = jax.nn.softmax(attn, axis=-1)
    out = jnp.einsum("bhnm,bhmd->bhnd", attn, v)
    out = jnp.transpose(out, (0, 2, 1, 3)).reshape(B, N, E)
    return out @ w_proj + b_proj


if __name__ == "__main__":
    B, N, E, H = 2, 8, 32, 4

    key = jax.random.PRNGKey(0)
    kx, kw1, kb1, kw2, kb2 = jax.random.split(key, 5)

    x = jax.random.normal(kx, (B, N, E), dtype=jnp.float32)
    # Deterministic synthetic parameters (shapes follow nn.Linear(E, 3E) /
    # nn.Linear(E, E), stored pre-transposed so y = x @ W + b).
    w_qkv = jax.random.normal(kw1, (E, 3 * E), dtype=jnp.float32) * 0.05
    b_qkv = jax.random.normal(kb1, (3 * E,), dtype=jnp.float32) * 0.05
    w_proj = jax.random.normal(kw2, (E, E), dtype=jnp.float32) * 0.05
    b_proj = jax.random.normal(kb2, (E,), dtype=jnp.float32) * 0.05

    # One-time weight layout transform (hoisted out of the per-call path).
    params = prepare_mhsa_weights(w_qkv, b_qkv, w_proj, b_proj, num_heads=H)

    out = multi_head_self_attention(x, *params, num_heads=H)
    out = jax.block_until_ready(out)

    ref = reference_mhsa(x, w_qkv, b_qkv, w_proj, b_proj, num_heads=H)
    assert out.shape == (B, N, E)
    # Kernel matmuls run with bf16 MXU inputs (f32 accumulation) and an approx
    # reciprocal for the softmax denominator, so compare against the f32
    # reference at bf16-level tolerance.
    assert jnp.allclose(out, ref, atol=1e-2, rtol=1e-2), "mismatch vs. reference"

    print("KERNEL_OK")
</pallas_src>

<mosaic_0001>
module attributes {stable_mosaic.version = 11 : i64} {
  func.func @_qkv_proj_kernel(%arg0: i32, %arg1: i32, %arg2: i32, %arg3: memref<1x8x32xf32, #tpu.memory_space<vmem>>, %arg4: memref<12x32x8xbf16, #tpu.memory_space<vmem>>, %arg5: memref<12x1x8xf32, #tpu.memory_space<vmem>>, %arg6: memref<1x1x8x8xbf16, #tpu.memory_space<vmem>>) attributes {dimension_semantics = [#tpu.dimension_semantics<parallel>, #tpu.dimension_semantics<parallel>, #tpu.dimension_semantics<arbitrary>], iteration_bounds = array<i64: 2, 1, 12>, scalar_prefetch = 0 : i64, scratch_operands = 0 : i64, tpu.core_type = #tpu.core_type<tc>, window_params = [{transform_indices = @transform_0, window_bounds = array<i64: 1, 8, 32>}, {pipeline_mode = #tpu.pipeline_mode<synchronous>, transform_indices = @transform_1, window_bounds = array<i64: 12, 32, 8>}, {pipeline_mode = #tpu.pipeline_mode<synchronous>, transform_indices = @transform_2, window_bounds = array<i64: 12, 1, 8>}, {transform_indices = @transform_3, window_bounds = array<i64: 1, 1, 8, 8>}]} {
    %c0 = arith.constant 0 : index
    %c0_0 = arith.constant 0 : index
    %c0_1 = arith.constant 0 : index
    %0 = vector.load %arg3[%c0, %c0_0, %c0_1] : memref<1x8x32xf32, #tpu.memory_space<vmem>>, vector<1x8x32xf32>
    %1 = vector.shape_cast %0 : vector<1x8x32xf32> to vector<8x32xf32>
    %2 = arith.truncf %1 : vector<8x32xf32> to vector<8x32xbf16>
    %3 = arith.index_cast %arg2 : i32 to index
    %c0_2 = arith.constant 0 : index
    %c0_3 = arith.constant 0 : index
    %4 = vector.load %arg4[%3, %c0_2, %c0_3] : memref<12x32x8xbf16, #tpu.memory_space<vmem>>, vector<1x32x8xbf16>
    %5 = vector.shape_cast %4 : vector<1x32x8xbf16> to vector<32x8xbf16>
    %cst = arith.constant dense<0.000000e+00> : vector<8x8xf32>
    %6 = tpu.matmul %2, %5, %cst {dimension_numbers = #tpu.dot_dimension_numbers<[1], [0], [0], [1], [0, 0, 1, 1], [], []>} : vector<8x32xbf16>, vector<32x8xbf16>, vector<8x8xf32> -> vector<8x8xf32>
    %7 = arith.index_cast %arg2 : i32 to index
    %c0_4 = arith.constant 0 : index
    %c0_5 = arith.constant 0 : index
    %8 = vector.load %arg5[%7, %c0_4, %c0_5] : memref<12x1x8xf32, #tpu.memory_space<vmem>>, vector<1x1x8xf32>
    %9 = vector.shape_cast %8 : vector<1x1x8xf32> to vector<1x8xf32>
    %10 = vector.broadcast %9 : vector<1x8xf32> to vector<8x8xf32>
    %11 = arith.addf %6, %10 : vector<8x8xf32>
    %12 = arith.truncf %11 : vector<8x8xf32> to vector<8x8xbf16>
    %c0_6 = arith.constant 0 : index
    %c0_7 = arith.constant 0 : index
    %c0_8 = arith.constant 0 : index
    %c0_9 = arith.constant 0 : index
    %13 = vector.load %arg6[%c0_6, %c0_7, %c0_8, %c0_9] : memref<1x1x8x8xbf16, #tpu.memory_space<vmem>>, vector<1x1x8x8xbf16>
    %14 = vector.shape_cast %13 : vector<1x1x8x8xbf16> to vector<8x8xbf16>
    %15 = vector.shape_cast %12 : vector<8x8xbf16> to vector<1x1x8x8xbf16>
    tpu.vector_store %arg6[%c0_6, %c0_7, %c0_8, %c0_9], %15 {strides = array<i32>} : memref<1x1x8x8xbf16, #tpu.memory_space<vmem>>, vector<1x1x8x8xbf16>,
    return
  }
  func.func @transform_0(%arg0: i32, %arg1: i32, %arg2: i32) -> (i32, i32, i32) {
    %c0_i32 = arith.constant 0 : i32
    %c0_i32_0 = arith.constant 0 : i32
    return %arg0, %arg1, %c0_i32 : i32, i32, i32
  }
  func.func @transform_1(%arg0: i32, %arg1: i32, %arg2: i32) -> (i32, i32, i32) {
    %c0_i32 = arith.constant 0 : i32
    %c0_i32_0 = arith.constant 0 : i32
    %c0_i32_1 = arith.constant 0 : i32
    %c0_i32_2 = arith.constant 0 : i32
    return %c0_i32, %c0_i32_0, %c0_i32_1 : i32, i32, i32
  }
  func.func @transform_2(%arg0: i32, %arg1: i32, %arg2: i32) -> (i32, i32, i32) {
    %c0_i32 = arith.constant 0 : i32
    %c0_i32_0 = arith.constant 0 : i32
    %c0_i32_1 = arith.constant 0 : i32
    %c0_i32_2 = arith.constant 0 : i32
    return %c0_i32, %c0_i32_0, %c0_i32_1 : i32, i32, i32
  }
  func.func @transform_3(%arg0: i32, %arg1: i32, %arg2: i32) -> (i32, i32, i32, i32) {
    %c0_i32 = arith.constant 0 : i32
    %c0_i32_0 = arith.constant 0 : i32
    return %arg0, %arg2, %arg1, %c0_i32 : i32, i32, i32, i32
  }
}

</mosaic_0001>

<llo_original>
// kernel: tpu_custom_call.1
$region0: #{tpu_custom_call.1}
  #allocation0 [shape = 'u32[]', space=smem, size = 0x4, offset = 0x4, fixed_abs, tag = 'smem constant byte address 0x4 - core index']
  #allocation1 [shape = 'u32[144,128]{1,0:T(1,128)}', space=vmem, size = 0x12000, scoped, tag = 'internal scratch']
  %s0 = inlined_call_operand.vmem [shape: f32[2,8,32], index: 0, kind: input, shape index: {}]
  %s1 = inlined_call_operand.vmem [shape: bf16[12,32,8], index: 1, kind: input, shape index: {}]
  %s2 = inlined_call_operand.vmem [shape: f32[12,1,8], index: 2, kind: input, shape index: {}]
  %s3 = inlined_call_operand.vmem [shape: bf16[2,12,8,8], index: 3, kind: output, shape index: {}]
  %s4 = sld [smem:[#allocation0]]
  $region45: #{tpu_custom_call.1} parent=0
    _
  %s6 = ssub.s32 1, %s4
  %s7 = scalar_select 0, %s6, %s4
  loop: start=0, step=1, limit=26
  $region2: #{tpu_custom_call.1} parent=0 // loop_pre_header
    _
  $region3: #{tpu_custom_call.1} parent=0 // loop_header
    %s9 = sphi 0, %s13
    %p10 = scmp.ge.s32.totalorder %s9, 26
    %s16 = sphi 0, %s35
    %s17 = sphi 0, %s31
    %s18 = sphi 0, %s27
    %s19 = sphi 0, %s16
    %s20 = sphi 0, %s17
    %s21 = sphi 0, %s18
    %s22 = sphi 0, %s19
    %s23 = sphi 0, %s20
    %s24 = sphi 0, %s21
    %s40 = sphi 0, %s42
    %s43 = sphi 0, %s40
    %s44 = sphi 0, %s43
    %s60 = sphi 0, %s44
    %s64 = sphi 0, %s64
    %s66 = sphi 0, %s64
    %s67 = sphi 0, %s66
    %s81 = sphi 0, %s67
    %s85 = sphi 0, %s85
    %s87 = sphi 0, %s85
    %s88 = sphi 0, %s87
    %s102 = sphi 0, %s88
    %s112 = sphi 0, %s114
    %s115 = sphi 0, %s112
    %s116 = sphi 0, %s115
    %s132 = sphi 0, %s116
  $region4: #{tpu_custom_call.1} parent=0 // loop_header_branch
    %12 = sbr.rel (%p10) target = $region8
  $region5: #{tpu_custom_call.1} parent=0 // loop_body
    %s14 = ssub.s32 %s9, 1
    %s15 = ssub.s32 %s9, 2
    %s25 = sadd.s32 1, %s18
    %p26 = scmp.ge.s32.totalorder %s25, 12
    %s27 = scalar_select %p26, 0, %s25
    %s28 = sadd.s32 1, %s17
    %s29 = scalar_select %p26, %s28, %s17
    %p30 = scmp.ge.s32.totalorder %s29, 1
    %s31 = scalar_select %p30, 0, %s29
    %s32 = sadd.s32 1, %s16
    %s33 = scalar_select %p30, %s32, %s16
    %p34 = scmp.ge.s32.totalorder %s33, 2
    %s35 = scalar_select %p34, 0, %s33
    %s36 = ssub.s32 %s16, %s35
    %s37 = ssub.s32 %s17, %s31
    %s38 = sor.u32 %s36, %s37
    %p39 = scmp.eq.s32.totalorder %s38, 0
    %s41 = sadd.s32 %s40, 1
    %s42 = scalar_select %p39, %s40, %s41
    %p45 = pneg %p39
    %p46 = scmp.eq.s32.totalorder %s9, 23
    %p47 = por %p45, %p46
    %p48 = scmp.ne.s32.totalorder %s40, %s43
    %p49 = scmp.eq.s32.totalorder %s9, 0
    %p50 = por %p48, %p49
    %p51 = scmp.ne.s32.totalorder %s40, %s43
    %p52 = scmp.eq.s32.totalorder %s14, 23
    %p53 = por %p51, %p52
    %p54 = scmp.ne.s32.totalorder %s43, %s44
    %p55 = scmp.eq.s32.totalorder %s14, 0
    %p56 = por %p54, %p55
    %p57 = scmp.ne.s32.totalorder %s43, %s44
    %p58 = scmp.eq.s32.totalorder %s15, 23
    %p59 = por %p57, %p58
    %p61 = scmp.ne.s32.totalorder %s44, %s60
    %p62 = scmp.eq.s32.totalorder %s15, 0
    %p63 = por %p61, %p62
    %s65 = sadd.s32 %s64, 1
    %p68 = scmp.eq.s32.totalorder %s9, 23
    %p69 = scmp.ne.s32.totalorder %s64, %s66
    %p70 = scmp.eq.s32.totalorder %s9, 0
    %p71 = por %p69, %p70
    %p72 = scmp.ne.s32.totalorder %s64, %s66
    %p73 = scmp.eq.s32.totalorder %s14, 23
    %p74 = por %p72, %p73
    %p75 = scmp.ne.s32.totalorder %s66, %s67
    %p76 = scmp.eq.s32.totalorder %s14, 0
    %p77 = por %p75, %p76
    %p78 = scmp.ne.s32.totalorder %s66, %s67
    %p79 = scmp.eq.s32.totalorder %s15, 23
    %p80 = por %p78, %p79
    %p82 = scmp.ne.s32.totalorder %s67, %s81
    %p83 = scmp.eq.s32.totalorder %s15, 0
    %p84 = por %p82, %p83
    %s86 = sadd.s32 %s85, 1
    %p89 = scmp.eq.s32.totalorder %s9, 23
    %p90 = scmp.ne.s32.totalorder %s85, %s87
    %p91 = scmp.eq.s32.totalorder %s9, 0
    %p92 = por %p90, %p91
    %p93 = scmp.ne.s32.totalorder %s85, %s87
    %p94 = scmp.eq.s32.totalorder %s14, 23
    %p95 = por %p93, %p94
    %p96 = scmp.ne.s32.totalorder %s87, %s88
    %p97 = scmp.eq.s32.totalorder %s14, 0
    %p98 = por %p96, %p97
    %p99 = scmp.ne.s32.totalorder %s87, %s88
    %p100 = scmp.eq.s32.totalorder %s15, 23
    %p101 = por %p99, %p100
    %p103 = scmp.ne.s32.totalorder %s88, %s102
    %p104 = scmp.eq.s32.totalorder %s15, 0
    %p105 = por %p103, %p104
    %s106 = ssub.s32 %s16, %s35
    %s107 = ssub.s32 %s18, %s27
    %s108 = sor.u32 %s106, %s107
    %s109 = ssub.s32 %s17, %s31
    %s110 = sor.u32 %s108, %s109
    %p111 = scmp.eq.s32.totalorder %s110, 0
    %s113 = sadd.s32 %s112, 1
    %s114 = scalar_select %p111, %s112, %s113
    %p117 = pneg %p111
    %p118 = scmp.eq.s32.totalorder %s9, 23
    %p119 = por %p117, %p118
    %p120 = scmp.ne.s32.totalorder %s112, %s115
    %p121 = scmp.eq.s32.totalorder %s9, 0
    %p122 = por %p120, %p121
    %p123 = scmp.ne.s32.totalorder %s112, %s115
    %p124 = scmp.eq.s32.totalorder %s14, 23
    %p125 = por %p123, %p124
    %p126 = scmp.ne.s32.totalorder %s115, %s116
    %p127 = scmp.eq.s32.totalorder %s14, 0
    %p128 = por %p126, %p127
    %p129 = scmp.ne.s32.totalorder %s115, %s116
    %p130 = scmp.eq.s32.totalorder %s15, 23
    %p131 = por %p129, %p130
    %p133 = scmp.ne.s32.totalorder %s116, %s132
    %p134 = scmp.eq.s32.totalorder %s15, 0
    %p135 = por %p133, %p134
    %p136 = scmp.le.s32.totalorder 1, %s9
    %p137 = scmp.lt.s32.totalorder %s9, 25
    %p138 = pnand %p136, %p137
    %p139 = pneg %p138
    // Predicated region
    $region9: #{tpu_custom_call.1} parent=5 // pred_check
      _
    $region10: #{tpu_custom_call.1} parent=5 // pred_check_branch
      %141 = sbr.rel (%p138) target = $region12
    $region11: #{tpu_custom_call.1} parent=5 // pred_region
      %s142 = ssub.s32 %s9, 1
      // Predicated region
      $region13: #{tpu_custom_call.1} parent=11 // pred_check
        %p143 = pneg %p77
      $region14: #{tpu_custom_call.1} parent=11 // pred_check_branch
        %145 = sbr.rel (%p143) target = $region16
      $region15: #{tpu_custom_call.1} parent=11 // pred_region
        _
      $region16: #{tpu_custom_call.1} parent=11 // pred_fallthru
        _
      // Predicated region
      $region17: #{tpu_custom_call.1} parent=11 // pred_check
        %p146 = pneg %p98
      $region18: #{tpu_custom_call.1} parent=11 // pred_check_branch
        %148 = sbr.rel (%p146) target = $region20
      $region19: #{tpu_custom_call.1} parent=11 // pred_region
        _
      $region20: #{tpu_custom_call.1} parent=11 // pred_fallthru
        _
    $region12: #{tpu_custom_call.1} parent=5 // pred_fallthru
      _
    %p149 = scmp.lt.s32.totalorder %s9, 24
    // Predicated region
    $region21: #{tpu_custom_call.1} parent=5 // pred_check
      %p150 = pneg %p149
    $region22: #{tpu_custom_call.1} parent=5 // pred_check_branch
      %152 = sbr.rel (%p150) target = $region24
    $region23: #{tpu_custom_call.1} parent=5 // pred_region
      // Predicated region
      $region25: #{tpu_custom_call.1} parent=23 // pred_check
        %p153 = pneg %p50
      $region26: #{tpu_custom_call.1} parent=23 // pred_check_branch
        %155 = sbr.rel (%p153) target = $region28
      $region27: #{tpu_custom_call.1} parent=23 // pred_region
        %p156 = scmp.lt.s32.totalorder %s16, 1
        %s157 = scalar_select %p156, %s16, 1
        %p158 = scmp.lt.s32.totalorder %s17, 0
        %s159 = scalar_select %p158, %s17, 0
        %s160 = sadd.s32 %s159, %s157
        %s161 = smul.addr %s160, 8
        %s162 = scalar_lea.vmem %s0, %s161
      $region28: #{tpu_custom_call.1} parent=23 // pred_fallthru
        _
    $region24: #{tpu_custom_call.1} parent=5 // pred_fallthru
      _
    %p163 = scmp.le.s32.totalorder 1, %s9
    %p164 = scmp.lt.s32.totalorder %s9, 25
    %p165 = pnand %p163, %p164
    %p166 = pneg %p165
    // Predicated region
    $region29: #{tpu_custom_call.1} parent=5 // pred_check
      _
    $region30: #{tpu_custom_call.1} parent=5 // pred_check_branch
      %168 = sbr.rel (%p165) target = $region32
    $region31: #{tpu_custom_call.1} parent=5 // pred_region
      %s169 = ssub.s32 %s9, 1
      %p170 = scmp.lt.s32.totalorder %s19, 1
      %s171 = scalar_select %p170, %s19, 1
      %p172 = scmp.lt.s32.totalorder %s20, 0
      %s173 = scalar_select %p172, %s20, 0
      %s174 = sadd.s32 %s173, %s171
      %s175 = smul.addr %s174, 8
      %s176 = scalar_lea.vmem %s0, %s175
      %p177 = pneg %p56
      %p178 = pneg %p53
      %p179 = pneg %p77
      %p180 = pneg %p74
      %p181 = pneg %p98
      %p182 = pneg %p95
      %p183 = pneg %p128
      %p184 = pneg %p125
      %p185 = scmp.lt.s32.totalorder %s19, 1
      %s186 = scalar_select %p185, %s19, 1
      %p187 = scmp.lt.s32.totalorder %s21, 11
      %s188 = scalar_select %p187, %s21, 11
      %p189 = scmp.lt.s32.totalorder %s20, 0
      %s190 = scalar_select %p189, %s20, 0
      %s191 = sadd.s32 %s190, %s188
      %s192 = smul.addr %s186, 12
      %s193 = sadd.s32 %s191, %s192
      %s194 = smul.addr %s193, 4
      %s195 = scalar_lea.vmem %s3, %s194
      %p196 = scmp.lt.s32.totalorder %s19, 1
      %s197 = scalar_select %p196, %s19, 1
      %p198 = scmp.lt.s32.totalorder %s20, 0
      %s199 = scalar_select %p198, %s20, 0
      %s200 = sadd.s32 %s199, %s197
      %s201 = smul.addr %s200, 8
      %s202 = scalar_lea.vmem %s0, %s201
      %p203 = scmp.lt.s32.totalorder %s19, 1
      %s204 = scalar_select %p203, %s19, 1
      %p205 = scmp.lt.s32.totalorder %s21, 11
      %s206 = scalar_select %p205, %s21, 11
      %p207 = scmp.lt.s32.totalorder %s20, 0
      %s208 = scalar_select %p207, %s20, 0
      %s209 = sadd.s32 %s208, %s206
      %s210 = smul.addr %s204, 12
      %s211 = sadd.s32 %s209, %s210
      %s212 = smul.addr %s211, 4
      %s213 = scalar_lea.vmem %s3, %s212
      %v215 = vld [vmem:[%s202] sm:$0xff]
      %v216 = vpack.c.bf16 %v215, %v215
      %s217 = smul.u32 %s21, 4
      %s218 = smul.addr %s217, 4
      %s219 = scalar_lea.vmem %s1, %s218
      %v220 = vld [vmem:[%s219] sm:$0xf]
      %v221 = vld [vmem:[%s219 + $0x4] sm:$0xf]
      %v222 = vld [vmem:[%s219 + $0x8] sm:$0xf]
      %v223 = vld [vmem:[%s219 + $0xc] sm:$0xf]
      %s224 = scalar_lea.vmem %s2, %s21
      %v225 = vld [vmem:[%s224] sm:$0x1]
      %v227 = vlaneseq
      %v228 = vshrl.u32 %v227, 7
      %v229 = vsub.s32 0, %v228
      %v230 = vrot.slane %v225, %v229
      %v236 = vunpack.c.l.b16 %v220
      %v237 = vunpack.c.l.b16 %v221
      %v238 = vunpack.c.l.b16 %v222
      %v239 = vunpack.c.l.b16 %v223
      %v240 = vpack.c.b16 %v237, %v236
      %v241 = vpack.c.b16 %v239, %v238
      %vm244 = vcmask 261120
      %v246 = vsel %vm244, %v216, 0
      %248 = vmatprep.subr.bf16.mxu0 0
      %249 = vmatpush1.bf16.msra.mxu0 0
      %250 = vmatprep.subr.bf16.mxu0 0
      %251 = vmatpush1.bf16.msra.mxu0 0
      %252 = vmatprep.subr.bf16.mxu0 0
      %253 = vmatpush1.bf16.msra.mxu0 0
      %254 = vmatprep.subr.bf16.mxu0 0
      %255 = vmatpush1.bf16.msra.mxu0 0
      %256 = vmatprep.subr.bf16.mxu0 0
      %257 = vmatpush1.bf16.msra.mxu0 0
      %258 = vmatprep.subr.bf16.mxu0 0
      %259 = vmatpush1.bf16.msra.mxu0 0
      %260 = vmatprep.subr.bf16.mxu0 0
      %261 = vmatpush1.bf16.msra.mxu0 %v241
      %262 = vmatprep.subr.bf16.mxu0 0
      %263 = vmatpush1.bf16.msra.mxu0 %v240
      %264 = vmatprep.subr.bf16.mxu0 0
      %265 = vmatpush2.bf16.msra.mxu0 0
      %266 = vmatprep.subr.bf16.mxu0 0
      %267 = vmatpush2.bf16.msra.mxu0 0
      %268 = vmatprep.subr.bf16.mxu0 0
      %269 = vmatpush2.bf16.msra.mxu0 0
      %270 = vmatprep.subr.bf16.mxu0 0
      %271 = vmatpush2.bf16.msra.mxu0 0
      %272 = vmatprep.subr.bf16.mxu0 0
      %273 = vmatpush2.bf16.msra.mxu0 0
      %274 = vmatprep.subr.bf16.mxu0 0
      %275 = vmatpush2.bf16.msra.mxu0 0
      %276 = vmatprep.subr.bf16.mxu0 0
      %277 = vmatpush2.bf16.msra.mxu0 0
      %278 = vmatprep.subr.bf16.mxu0 0
      %279 = vmatpush2.bf16.msra.mxu0 0
      %280 = vmatprep.mubr.bf16.mxu0 0
      %281 = vmatmul.mubr.bf16.gmra.mxu0 %v246
      %v282 = vpop.f32.mrf.mxu0
      %v283 = vadd.f32 %v230, %v282
      %v284 = vpop.f32.mrf.mxu0
      %v285 = vpop.f32.mrf.mxu0
      %v286 = vpop.f32.mrf.mxu0
      %287 = vdwg.mxu0
      %v288 = vpack.c.bf16 %v283, %v283
      %vm289 = vcmask 60416
      %290 = vst.msk [vmem:[%s213] sm:$0xf] %vm289, %v288
      %p291 = scmp.lt.s32.totalorder %s19, 1
      %s292 = scalar_select %p291, %s19, 1
      %p293 = scmp.lt.s32.totalorder %s21, 11
      %s294 = scalar_select %p293, %s21, 11
      %p295 = scmp.lt.s32.totalorder %s20, 0
      %s296 = scalar_select %p295, %s20, 0
      %s297 = sadd.s32 %s296, %s294
      %s298 = smul.addr %s292, 12
      %s299 = sadd.s32 %s297, %s298
      %s300 = smul.addr %s299, 4
      %s301 = scalar_lea.vmem %s3, %s300
      // Predicated region
      $region33: #{tpu_custom_call.1} parent=31 // pred_check
        %p302 = pneg %p125
      $region34: #{tpu_custom_call.1} parent=31 // pred_check_branch
        %304 = sbr.rel (%p302) target = $region36
      $region35: #{tpu_custom_call.1} parent=31 // pred_region
        _
      $region36: #{tpu_custom_call.1} parent=31 // pred_fallthru
        _
    $region32: #{tpu_custom_call.1} parent=5 // pred_fallthru
      _
    %p305 = scmp.le.s32.totalorder 2, %s9
    // Predicated region
    $region37: #{tpu_custom_call.1} parent=5 // pred_check
      %p306 = pneg %p305
    $region38: #{tpu_custom_call.1} parent=5 // pred_check_branch
      %308 = sbr.rel (%p306) target = $region40
    $region39: #{tpu_custom_call.1} parent=5 // pred_region
      %s309 = ssub.s32 %s9, 2
      // Predicated region
      $region41: #{tpu_custom_call.1} parent=39 // pred_check
        %p310 = pneg %p131
      $region42: #{tpu_custom_call.1} parent=39 // pred_check_branch
        %312 = sbr.rel (%p310) target = $region44
      $region43: #{tpu_custom_call.1} parent=39 // pred_region
        %p313 = scmp.lt.s32.totalorder %s22, 1
        %s314 = scalar_select %p313, %s22, 1
        %p315 = scmp.lt.s32.totalorder %s24, 11
        %s316 = scalar_select %p315, %s24, 11
        %p317 = scmp.lt.s32.totalorder %s23, 0
        %s318 = scalar_select %p317, %s23, 0
        %s319 = sadd.s32 %s318, %s316
        %s320 = smul.addr %s314, 12
        %s321 = sadd.s32 %s319, %s320
        %s322 = smul.addr %s321, 4
        %s323 = scalar_lea.vmem %s3, %s322
      $region44: #{tpu_custom_call.1} parent=39 // pred_fallthru
        _
    $region40: #{tpu_custom_call.1} parent=5 // pred_fallthru
      _
  $region6: #{tpu_custom_call.1} parent=0 // loop_footer
    %s13 = sadd.s32 1, %s9
  $region7: #{tpu_custom_call.1} parent=0 // loop_footer_branch
    %8 = sbr.rel target = $region3
  $region8: #{tpu_custom_call.1} parent=0 // loop_exit
    _

</llo_original>
